<compile_context>
chip_gen: v6e
topology: v6e:2x2x1
jax: 0.10.0
libtpu: 0.0.40
codegen_flags: <defaults>
</compile_context>

<pallas_src>
import functools

import jax
import jax.numpy as jnp
from jax import lax
from jax.experimental import pallas as pl
from jax.experimental.pallas import tpu as pltpu


def _soft_focal_kernel(pred_ref, tgt_ref, *refs, gamma, alpha, n_rows,
                       tile_n, steps_per_core, has_weight):
    if has_weight:
        w_ref, out_ref = refs
    else:
        (out_ref,) = refs
        w_ref = None

    c = pl.program_id(0)          # "core" (parallel) axis
    s = pl.program_id(1)          # step (arbitrary / reduction) axis

    # Zero the resident per-core accumulator on the first step.
    @pl.when(s == 0)
    def _():
        out_ref[...] = jnp.zeros_like(out_ref)

    pred = pred_ref[...].astype(jnp.float32)              # (TN, C) f32
    tgt = tgt_ref[...]                                     # (TN, 1) int32

    # Stable log-softmax of the target logit (no full softmax tensor).
    m = jnp.max(pred, axis=1, keepdims=True)               # (TN, 1)
    denom = jnp.sum(jnp.exp(pred - m), axis=1, keepdims=True)
    cls_ids = lax.broadcasted_iota(jnp.int32, (1, pred.shape[1]), 1)  # (1, C)
    logit_t = jnp.sum(jnp.where(cls_ids == tgt, pred, 0.0),
                      axis=1, keepdims=True)               # (TN, 1)
    log_p = (logit_t - m) - jnp.log(denom)                 # (TN, 1)
    p = jnp.exp(log_p)

    one_minus = 1.0 - p
    g = float(gamma)
    if g == 2.0:                                           # default: plain multiply
        mod = one_minus * one_minus
    elif g.is_integer() and g >= 0.0:
        mod = jnp.ones_like(one_minus)
        for _ in range(int(g)):
            mod = mod * one_minus
    else:
        mod = jnp.power(one_minus, g)

    loss = (-alpha) * mod * log_p                          # (TN, 1)
    if has_weight:
        loss = loss * w_ref[...].astype(jnp.float32)

    # Tail-row / phantom-step masking.  Must be a select (NOT a weight multiply):
    # the OOB tail of a partial block holds garbage logits that may be inf/NaN.
    global_step = c * steps_per_core + s
    row_start = global_step * tile_n
    row_ids = row_start + lax.broadcasted_iota(jnp.int32, loss.shape, 0)
    loss = jnp.where(row_ids < n_rows, loss, 0.0)

    out_ref[...] += jnp.sum(loss).reshape(1, 1)


def soft_focal_loss(pred, target, weight=None, avg_factor=None,
                    gamma=2.0, alpha=0.25, reduction="mean", tile_n=4096):
    """JAX wrapper reproducing SoftFocalLoss.forward semantics.

    pred:   (N, C) float (f32 or bf16)
    target: (N,)   int class labels (assumed in-range)
    weight: optional (N,) or (N, 1) per-sample weight
    Returns sum(loss), or sum(loss)/avg_factor when reduction == 'mean' and
    avg_factor is given (exactly as the PyTorch module; loss_weight is never
    applied in forward()).
    """
    pred = jnp.asarray(pred)
    N, C = pred.shape
    tgt2d = jnp.asarray(target).reshape(N, 1).astype(jnp.int32)
    has_weight = weight is not None
    if has_weight:
        w2d = jnp.asarray(weight, dtype=jnp.float32).reshape(N, 1)

    itemsize = jnp.dtype(pred.dtype).itemsize
    sub = max(8, 32 // itemsize)      # sublane packing: 8 f32 / 16 bf16 / 32 int8

    # Per-row VMEM footprint: double-buffered input DMA tile plus ~4 live f32
    # (TN, C) temporaries inside the kernel (cast pred, exp(pred - m), the
    # one-hot select, misc), plus a few (TN, 1) columns.  Budget 32 MiB so the
    # real footprint stays under every generation's physical VMEM (v7x: 64 MiB)
    # with the raised vmem_limit_bytes below.
    per_row_bytes = 2 * C * itemsize + 16 * C + 64
    vmem_budget = 32 * 1024 * 1024
    rows_by_vmem = max(sub, vmem_budget // per_row_bytes)
    tn = max(sub, (min(tile_n, rows_by_vmem) // sub) * sub)
    tn = min(tn, ((N + sub - 1) // sub) * sub)   # don't over-allocate for tiny N

    nblocks = -(-N // tn)                         # cdiv; tail block masked in-kernel
    n_cores = min(2, nblocks)                     # leading "parallel" axis (megacore)
    steps = -(-nblocks // n_cores)

    def row_block(c, s):
        # Clamp phantom steps (n_cores * steps > nblocks) onto the last real
        # block; their contribution is fully masked out inside the kernel.
        return (jnp.minimum(c * steps + s, nblocks - 1), 0)

    in_specs = [pl.BlockSpec((tn, C), row_block),
                pl.BlockSpec((tn, 1), row_block)]
    args = [pred, tgt2d]
    if has_weight:
        in_specs.append(pl.BlockSpec((tn, 1), row_block))
        args.append(w2d)

    kernel = functools.partial(
        _soft_focal_kernel, gamma=float(gamma), alpha=float(alpha),
        n_rows=N, tile_n=tn, steps_per_core=steps, has_weight=has_weight)

    cost = pl.CostEstimate(
        flops=int(10 * N * C),
        transcendentals=int(N * (C + 3)),
        bytes_accessed=int(N * C * itemsize + N * 4 * (1 + int(has_weight))
                           + n_cores * 4),
    )

    partials = pl.pallas_call(
        kernel,
        out_shape=jax.ShapeDtypeStruct((n_cores, 1), jnp.float32),
        grid=(n_cores, steps),
        in_specs=in_specs,
        out_specs=pl.BlockSpec((1, 1), lambda c, s: (c, 0)),
        compiler_params=pltpu.CompilerParams(
            dimension_semantics=("parallel", "arbitrary"),
            vmem_limit_bytes=48 * 1024 * 1024),
        cost_estimate=cost,
    )(*args)

    loss = jnp.sum(partials)                      # tiny (n_cores,) reduce
    if reduction == "mean" and avg_factor is not None:
        loss = loss / avg_factor
    # NOTE: matches the PyTorch forward exactly — every other case returns the
    # sum, and self.loss_weight is never applied in forward().
    # TODO(synk): for small C (< 128) in production, repack rows to a lane-dense
    # layout (fold k = 128 // C rows into the lane dim) to recover VPU/EUP lanes.
    # TODO(synk): for very large C, add a C-tiled variant with an online
    # logsumexp carry so the kernel stays at HBM roofline on v7x's 64 MiB VMEM.
    return loss


def _reference(pred, target, weight=None, avg_factor=None,
               gamma=2.0, alpha=0.25, reduction="mean"):
    soft = jax.nn.softmax(jnp.asarray(pred).astype(jnp.float32), axis=1)
    mask = jax.nn.one_hot(target, pred.shape[1], dtype=jnp.float32)
    probs = jnp.sum(soft * mask, axis=1, keepdims=True)
    loss = -alpha * jnp.power(1.0 - probs, gamma) * jnp.log(probs)
    if weight is not None:
        loss = loss * jnp.asarray(weight, jnp.float32).reshape(-1, 1)
    if reduction == "mean" and avg_factor is not None:
        return jnp.sum(loss) / avg_factor
    return jnp.sum(loss)


if __name__ == "__main__":
    key = jax.random.PRNGKey(0)
    k1, k2, k3 = jax.random.split(key, 3)

    # 1) default config: gamma=2.0, alpha=0.25, reduction='mean', no avg_factor -> sum
    N, C = 8, 32
    pred = jax.random.normal(k1, (N, C), dtype=jnp.float32)
    target = jax.random.randint(k2, (N,), 0, C, dtype=jnp.int32)
    weight = jax.random.uniform(k3, (N,), dtype=jnp.float32)

    out = jax.block_until_ready(soft_focal_loss(pred, target))
    ref = _reference(pred, target)
    assert jnp.allclose(out, ref, rtol=1e-5, atol=1e-5), (out, ref)

    # 2) per-sample weight + avg_factor
    out_w = jax.block_until_ready(
        soft_focal_loss(pred, target, weight=weight, avg_factor=N))
    ref_w = _reference(pred, target, weight=weight, avg_factor=N)
    assert jnp.allclose(out_w, ref_w, rtol=1e-5, atol=1e-5), (out_w, ref_w)

    # 3) non-power gamma exercises the jnp.power path
    out_g = jax.block_until_ready(
        soft_focal_loss(pred, target, gamma=1.5, alpha=0.5))
    ref_g = _reference(pred, target, gamma=1.5, alpha=0.5)
    assert jnp.allclose(out_g, ref_g, rtol=1e-5, atol=1e-5), (out_g, ref_g)

    # 4) non-divisible N: partial tail block + phantom megacore step (clamped,
    #    fully masked), with weight and avg_factor.
    N2 = 40
    pred2 = jax.random.normal(k1, (N2, C), dtype=jnp.float32)
    target2 = jax.random.randint(k2, (N2,), 0, C, dtype=jnp.int32)
    weight2 = jax.random.uniform(k3, (N2,), dtype=jnp.float32)
    out2 = jax.block_until_ready(
        soft_focal_loss(pred2, target2, weight=weight2, avg_factor=N2, tile_n=16))
    ref2 = _reference(pred2, target2, weight=weight2, avg_factor=N2)
    assert jnp.allclose(out2, ref2, rtol=1e-5, atol=1e-5), (out2, ref2)

    # 5) bf16 inputs (DMA'd as bf16, cast to f32 in-kernel; sublane align = 16),
    #    odd block count exercises the clamped phantom step again.
    N3, C3 = 48, 16
    pred3 = jax.random.normal(k1, (N3, C3), dtype=jnp.bfloat16)
    target3 = jax.random.randint(k2, (N3,), 0, C3, dtype=jnp.int32)
    out3 = jax.block_until_ready(soft_focal_loss(pred3, target3, tile_n=16))
    ref3 = _reference(pred3, target3)
    assert jnp.allclose(out3, ref3, rtol=1e-4, atol=1e-4), (out3, ref3)

    print("KERNEL_OK")
</pallas_src>

<mosaic_0001>
module attributes {stable_mosaic.version = 11 : i64} {
  func.func @_soft_focal_kernel(%arg0: i32, %arg1: i32, %arg2: memref<8x32xf32, #tpu.memory_space<vmem>>, %arg3: memref<8x1xi32, #tpu.memory_space<vmem>>, %arg4: memref<1x1xf32, #tpu.memory_space<vmem>>) attributes {dimension_semantics = [#tpu.dimension_semantics<parallel>, #tpu.dimension_semantics<arbitrary>], iteration_bounds = array<i64: 1, 1>, scalar_prefetch = 0 : i64, scratch_operands = 0 : i64, tpu.core_type = #tpu.core_type<tc>, window_params = [{transform_indices = @transform_0, window_bounds = array<i64: 8, 32>}, {transform_indices = @transform_1, window_bounds = array<i64: 8, 1>}, {transform_indices = @transform_2, window_bounds = array<i64: 1, 1>}]} {
    %c0_i32 = arith.constant 0 : i32
    %0 = arith.cmpi eq, %arg1, %c0_i32 : i32
    %1 = arith.extui %0 : i1 to i32
    %c0_i32_0 = arith.constant 0 : i32
    %2 = arith.cmpi ne, %1, %c0_i32_0 : i32
    scf.if %2 {
      %cst_16 = arith.constant 0.000000e+00 : f32
      %48 = vector.broadcast %cst_16 : f32 to vector<1x1xf32>
      %c0_17 = arith.constant 0 : index
      %c0_18 = arith.constant 0 : index
      %49 = vector.load %arg4[%c0_17, %c0_18] : memref<1x1xf32, #tpu.memory_space<vmem>>, vector<1x1xf32>
      tpu.vector_store %arg4[%c0_17, %c0_18], %48 {strides = array<i32>} : memref<1x1xf32, #tpu.memory_space<vmem>>, vector<1x1xf32>,
    } else {
    }
    %c0 = arith.constant 0 : index
    %c0_1 = arith.constant 0 : index
    %3 = vector.load %arg2[%c0, %c0_1] : memref<8x32xf32, #tpu.memory_space<vmem>>, vector<8x32xf32>
    %c0_2 = arith.constant 0 : index
    %c0_3 = arith.constant 0 : index
    %4 = vector.load %arg3[%c0_2, %c0_3] : memref<8x1xi32, #tpu.memory_space<vmem>>, vector<8x1xi32>
    %cst = arith.constant dense<0xFF800000> : vector<8xf32>
    %5 = vector.multi_reduction <maximumf>, %3, %cst [1] : vector<8x32xf32> to vector<8xf32>
    %6 = vector.shape_cast %5 : vector<8xf32> to vector<8x1xf32>
    %7 = vector.broadcast %6 : vector<8x1xf32> to vector<8x32xf32>
    %8 = arith.subf %3, %7 : vector<8x32xf32>
    %9 = math.exp %8 : vector<8x32xf32>
    %cst_4 = arith.constant dense<0.000000e+00> : vector<8xf32>
    %10 = vector.multi_reduction <add>, %9, %cst_4 [1] : vector<8x32xf32> to vector<8xf32>
    %11 = vector.shape_cast %10 : vector<8xf32> to vector<8x1xf32>
    %12 = tpu.iota {dimensions = array<i32: 1>} : vector<1x32xi32>
    %13 = vector.broadcast %12 : vector<1x32xi32> to vector<8x32xi32>
    %14 = vector.broadcast %4 : vector<8x1xi32> to vector<8x32xi32>
    %15 = arith.cmpi eq, %13, %14 : vector<8x32xi32>
    %cst_5 = arith.constant 0.000000e+00 : f32
    %16 = vector.broadcast %cst_5 : f32 to vector<8x32xf32>
    %17 = arith.select %15, %3, %16 : vector<8x32xi1>, vector<8x32xf32>
    %cst_6 = arith.constant dense<0.000000e+00> : vector<8xf32>
    %18 = vector.multi_reduction <add>, %17, %cst_6 [1] : vector<8x32xf32> to vector<8xf32>
    %19 = vector.shape_cast %18 : vector<8xf32> to vector<8x1xf32>
    %20 = arith.subf %19, %6 : vector<8x1xf32>
    %21 = math.log %11 : vector<8x1xf32>
    %22 = arith.subf %20, %21 : vector<8x1xf32>
    %23 = math.exp %22 : vector<8x1xf32>
    %cst_7 = arith.constant 1.000000e+00 : f32
    %24 = vector.broadcast %cst_7 : f32 to vector<8x1xf32>
    %25 = arith.subf %24, %23 : vector<8x1xf32>
    %26 = arith.mulf %25, %25 : vector<8x1xf32>
    %cst_8 = arith.constant -2.500000e-01 : f32
    %27 = vector.broadcast %cst_8 : f32 to vector<8x1xf32>
    %28 = arith.mulf %27, %26 : vector<8x1xf32>
    %29 = arith.mulf %28, %22 : vector<8x1xf32>
    %c1_i32 = arith.constant 1 : i32
    %30 = arith.muli %arg0, %c1_i32 : i32
    %31 = arith.addi %30, %arg1 : i32
    %c8_i32 = arith.constant 8 : i32
    %32 = arith.muli %31, %c8_i32 : i32
    %33 = tpu.iota {dimensions = array<i32: 0>} : vector<8x1xi32>
    %34 = vector.broadcast %32 : i32 to vector<8x1xi32>
    %35 = arith.addi %34, %33 : vector<8x1xi32>
    %c8_i32_9 = arith.constant 8 : i32
    %36 = vector.broadcast %c8_i32_9 : i32 to vector<8x1xi32>
    %37 = arith.cmpi slt, %35, %36 : vector<8x1xi32>
    %cst_10 = arith.constant 0.000000e+00 : f32
    %38 = vector.broadcast %cst_10 : f32 to vector<8x1xf32>
    %39 = arith.select %37, %29, %38 : vector<8x1xi1>, vector<8x1xf32>
    %c0_11 = arith.constant 0 : index
    %c0_12 = arith.constant 0 : index
    %40 = vector.load %arg4[%c0_11, %c0_12] : memref<1x1xf32, #tpu.memory_space<vmem>>, vector<1x1xf32>
    %41 = vector.shape_cast %39 : vector<8x1xf32> to vector<1x8x1xf32>
    %cst_13 = arith.constant dense<0.000000e+00> : vector<1xf32>
    %42 = vector.multi_reduction <add>, %41, %cst_13 [1, 2] : vector<1x8x1xf32> to vector<1xf32>
    %43 = vector.shape_cast %42 : vector<1xf32> to vector<1x1x1xf32>
    %44 = vector.extract %43[0, 0, 0] : f32 from vector<1x1x1xf32>
    %45 = vector.broadcast %44 : f32 to vector<1x1xf32>
    %46 = arith.addf %40, %45 : vector<1x1xf32>
    %c0_14 = arith.constant 0 : index
    %c0_15 = arith.constant 0 : index
    %47 = vector.load %arg4[%c0_14, %c0_15] : memref<1x1xf32, #tpu.memory_space<vmem>>, vector<1x1xf32>
    tpu.vector_store %arg4[%c0_14, %c0_15], %46 {strides = array<i32>} : memref<1x1xf32, #tpu.memory_space<vmem>>, vector<1x1xf32>,
    return
  }
  func.func @transform_0(%arg0: i32, %arg1: i32) -> (i32, i32) {
    %c1_i32 = arith.constant 1 : i32
    %0 = arith.muli %arg0, %c1_i32 : i32
    %1 = arith.addi %0, %arg1 : i32
    %c0_i32 = arith.constant 0 : i32
    %2 = arith.minsi %1, %c0_i32 : i32
    %c0_i32_0 = arith.constant 0 : i32
    %c0_i32_1 = arith.constant 0 : i32
    return %2, %c0_i32_0 : i32, i32
  }
  func.func @transform_1(%arg0: i32, %arg1: i32) -> (i32, i32) {
    %c1_i32 = arith.constant 1 : i32
    %0 = arith.muli %arg0, %c1_i32 : i32
    %1 = arith.addi %0, %arg1 : i32
    %c0_i32 = arith.constant 0 : i32
    %2 = arith.minsi %1, %c0_i32 : i32
    %c0_i32_0 = arith.constant 0 : i32
    %c0_i32_1 = arith.constant 0 : i32
    return %2, %c0_i32_0 : i32, i32
  }
  func.func @transform_2(%arg0: i32, %arg1: i32) -> (i32, i32) {
    %c0_i32 = arith.constant 0 : i32
    %c0_i32_0 = arith.constant 0 : i32
    return %arg0, %c0_i32 : i32, i32
  }
}

</mosaic_0001>

<llo_original>
// kernel: tpu_custom_call.1
$region0: #{tpu_custom_call.1}
  #allocation0 [shape = 'u32[]', space=smem, size = 0x4, offset = 0x4, fixed_abs, tag = 'smem constant byte address 0x4 - core index']
  #allocation1 [shape = 'u32[144,128]{1,0:T(1,128)}', space=vmem, size = 0x12000, scoped, tag = 'internal scratch']
  %s0 = inlined_call_operand.vmem [shape: f32[8,32], index: 0, kind: input, shape index: {}]
  %s1 = inlined_call_operand.vmem [shape: s32[8,1], index: 1, kind: input, shape index: {}]
  %s2 = inlined_call_operand.hbm [shape: f32[1,1], index: 2, kind: output, shape index: {}]
  %s3 = sld [smem:[#allocation0]]
  $region22: #{tpu_custom_call.1} parent=0
    _
  %s5 = ssub.s32 1, %s3
  %s6 = scalar_select 0, %s5, %s3
  $region1: #{tpu_custom_call.1} parent=0
    #allocation2 [shape = 'u8[512]{0}', space=vmem, size = 0x400, scoped, tag = 'output window, operand 0, single buffered']
    #allocation3 [shape = 's32[1]{0}', space=sflag, size = 0x4, scoped, tag = 'scoped memory for tpu_custom_call.1']
    %7 = vsyncpa [#allocation3], 0
    // Predicated region
    $region2: #{tpu_custom_call.1} parent=1 // pred_check
      _
    $region3: #{tpu_custom_call.1} parent=1 // pred_check_branch
      %9 = sbr.rel (0) target = $region5
    $region4: #{tpu_custom_call.1} parent=1 // pred_region
      %s10 = sadd.s32 0, 0
      %p11 = scmp.lt.s32.totalorder %s10, 0
      %s12 = scalar_select %p11, %s10, 0
      %p13 = scmp.lt.s32.totalorder %s12, 0
      %s14 = scalar_select %p13, %s12, 0
      %s15 = smul.addr %s14, 8
      %s16 = scalar_lea.vmem %s0, %s15
      %s17 = sadd.s32 0, 0
      %p18 = scmp.lt.s32.totalorder %s17, 0
      %s19 = scalar_select %p18, %s17, 0
    $region5: #{tpu_custom_call.1} parent=1 // pred_fallthru
      _
    // Predicated region
    $region6: #{tpu_custom_call.1} parent=1 // pred_check
      _
    $region7: #{tpu_custom_call.1} parent=1 // pred_check_branch
      %21 = sbr.rel (0) target = $region9
    $region8: #{tpu_custom_call.1} parent=1 // pred_region
      %s22 = sadd.s32 0, 0
      %p23 = scmp.lt.s32.totalorder %s22, 0
      %s24 = scalar_select %p23, %s22, 0
      %p25 = scmp.lt.s32.totalorder %s24, 0
      %s26 = scalar_select %p25, %s24, 0
      %s27 = smul.addr %s26, 8
      %s28 = scalar_lea.vmem %s1, %s27
      %s29 = sadd.s32 0, 0
      %p30 = scmp.lt.s32.totalorder %s29, 0
      %s31 = scalar_select %p30, %s29, 0
    $region9: #{tpu_custom_call.1} parent=1 // pred_fallthru
      _
    %s32 = sadd.s32 0, 0
    %p33 = scmp.lt.s32.totalorder %s32, 0
    %s34 = scalar_select %p33, %s32, 0
    %p35 = scmp.lt.s32.totalorder %s34, 0
    %s36 = scalar_select %p35, %s34, 0
    %s37 = smul.addr %s36, 8
    %s38 = scalar_lea.vmem %s0, %s37
    %s39 = sadd.s32 0, 0
    %p40 = scmp.lt.s32.totalorder %s39, 0
    %s41 = scalar_select %p40, %s39, 0
    %p42 = scmp.lt.s32.totalorder %s41, 0
    %s43 = scalar_select %p42, %s41, 0
    %s44 = smul.addr %s43, 8
    %s45 = scalar_lea.vmem %s1, %s44
    %s46 = sadd.s32 0, 0
    %p47 = scmp.lt.s32.totalorder %s46, 0
    %s48 = scalar_select %p47, %s46, 0
    %p49 = scmp.lt.s32.totalorder %s48, 0
    %s50 = scalar_select %p49, %s48, 0
    %s51 = smul.addr %s50, 8
    %s52 = scalar_lea.vmem %s0, %s51
    %s53 = sadd.s32 0, 0
    %p54 = scmp.lt.s32.totalorder %s53, 0
    %s55 = scalar_select %p54, %s53, 0
    %s56 = sadd.s32 0, 0
    %p57 = scmp.lt.s32.totalorder %s56, 0
    %s58 = scalar_select %p57, %s56, 0
    %p59 = scmp.lt.s32.totalorder %s58, 0
    %s60 = scalar_select %p59, %s58, 0
    %s61 = smul.addr %s60, 8
    %s62 = scalar_lea.vmem %s1, %s61
    %s63 = sadd.s32 0, 0
    %p64 = scmp.lt.s32.totalorder %s63, 0
    %s65 = scalar_select %p64, %s63, 0
    %p66 = scmp.eq.s32.totalorder 0, 0
    // Predicated region
    $region10: #{tpu_custom_call.1} parent=1 // pred_check
      %p67 = pneg %p66
    $region11: #{tpu_custom_call.1} parent=1 // pred_check_branch
      %69 = sbr.rel (%p67) target = $region13
    $region12: #{tpu_custom_call.1} parent=1 // pred_region
      %vm70 = vcmask 0
      %71 = vst.msk [vmem:[#allocation2] sm:$0x1] %vm70, 0.0
    $region13: #{tpu_custom_call.1} parent=1 // pred_fallthru
      _
    %v72 = vld [vmem:[%s52] sm:$0xff]
    %v73 = vld [vmem:[%s62] sm:$0xff]
    %vm74 = vcmask 261120
    %v75 = vsel %vm74, %v72, -inf
    %76 = vmax.xlane.f32.xlu0 %v75
    %v77 = vpop.xlane.xlu0 %76
    %v78 = vsub.f32 %v72, %v77
    %v79 = vmul.f32 %v78, 1.442695
    %v80 = vpow.pop %v79
    %v81 = vsel %vm74, %v80, 0.0
    %82 = vadd.xlane.f32.xlu0 %v81
    %v83 = vpop.xlane.xlu0 %82
    %v84 = vlaneseq
    %v85 = vand.u32 %v84, 127
    %86 = vset.pattern.permute.xlu0 0
    %87 = vperm.xlu0 %86, %v73
    %v88 = vpop.permute.xlu0 %87
    %vm89 = vcmp.eq.s32.totalorder %v85, %v88
    %v90 = vsel %vm89, %v72, 0.0
    %v91 = vsel %vm74, %v90, 0.0
    %92 = vadd.xlane.f32.xlu0 %v91
    %v93 = vpop.xlane.xlu0 %92
    %v94 = vsub.f32 %v93, %v77
    %v95 = vlog2.pop %v83
    %v96 = vmul.f32 %v95, 0.6931472
    %v97 = vsub.f32 %v94, %v96
    %v98 = vmul.f32 %v97, 1.442695
    %v99 = vpow.pop %v98
    %v100 = vsub.f32 1.0, %v99
    %v101 = vmul.f32 %v100, %v100
    %v102 = vmul.f32 %v101, -0.25
    %v103 = vmul.f32 %v102, %v97
    %s104 = sadd.s32 0, 0
    %s105 = smul.u32 %s104, 8
    %v106 = vlaneseq
    %v107 = vshrl.u32 %v106, 7
    %v108 = vstv %s105
    %v109 = vadd.s32 %v108, %v107
    %vm110 = vcmp.lt.s32.totalorder %v109, 8
    %v111 = vsel %vm110, %v103, 0.0
    %v112 = vld [vmem:[#allocation2] sm:$0x1]
    %vm113 = vcmask 7168
    %v114 = vsel %vm113, %v111, 0.0
    %115 = vadd.xlane.f32.xlu0 %v114
    %v116 = vpop.xlane.xlu0 %115
    %v117 = vrot.slane %v116, 4
    %v118 = vadd.f32 %v116, %v117
    %v119 = vrot.slane %v118, 2
    %v120 = vadd.f32 %v118, %v119
    %v121 = vrot.slane %v120, 1
    %v122 = vadd.f32 %v120, %v121
    %s123 = vtos %v122
    %v124 = vstv %s123
    %v125 = vadd.f32 %v112, %v124
    %vm126 = vcmask 0
    %127 = vst.msk [vmem:[#allocation2] sm:$0x1] %vm126, %v125
    // Predicated region
    $region14: #{tpu_custom_call.1} parent=1 // pred_check
      _
    $region15: #{tpu_custom_call.1} parent=1 // pred_check_branch
      %129 = sbr.rel (0) target = $region17
    $region16: #{tpu_custom_call.1} parent=1 // pred_region
      %s131 = ssub.s32 16, 16
      %132 = vsyncadd [#allocation3], %s131
      %s134 = sshll.u32 [#allocation2], 4
      %s135 = int_to_ptr.vmem [resolvable:$true] %s134
      %137 = dma.vmem_to_hbm [thread:$0]  %s135, 16, %s2, [#allocation3]
    $region17: #{tpu_custom_call.1} parent=1 // pred_fallthru
      _
    // Predicated region
    $region18: #{tpu_custom_call.1} parent=1 // pred_check
      _
    $region19: #{tpu_custom_call.1} parent=1 // pred_check_branch
      %139 = sbr.rel (0) target = $region21
    $region20: #{tpu_custom_call.1} parent=1 // pred_region
      %140 = dma.done [#allocation3], 16
    $region21: #{tpu_custom_call.1} parent=1 // pred_fallthru
      _
    %141 = vsyncpa [#allocation3], 1

</llo_original>
